<compile_context>
chip_gen: v7x
topology: tpu7x:2x2x1
jax: 0.10.0
libtpu: 0.0.40
codegen_flags: <defaults>
</compile_context>

<pallas_src>
import jax
import jax.numpy as jnp
from jax.experimental import pallas as pl
from jax.experimental.pallas import tpu as pltpu

FEAT = 51
_DEFAULT_TM = 8192          # rows per tile (see VMEM math above: ~16 MiB double-buffered)
_VMEM_LIMIT_BYTES = 32 << 20  # raise v5e's 16 MiB scoped default; fine on v6e/v7x


def _round_up(v, m):
    return ((v + m - 1) // m) * m


def aggr_kernel(x_ref, wt_ref, b_ref, o_ref):
    # Fused relu -> linear: y = relu(x) @ W^T + b.
    # wt_ref holds the pre-transposed weight (in, out), so this is a plain
    # MXU-friendly (rows, in) x (in, out) matmul with f32 accumulation.
    x = jnp.maximum(x_ref[...], 0.0)
    y = jnp.dot(x, wt_ref[...], preferred_element_type=jnp.float32)
    o_ref[...] = (y + b_ref[...]).astype(o_ref.dtype)


def aggr_net_forward(x, weight, bias, *, tm=_DEFAULT_TM):
    """x: (..., 51); weight: (51, 51) PyTorch (out, in) layout; bias: (51,)."""
    x2d = x.reshape(-1, FEAT)          # matches x.view(-1, 51) output semantics
    n = x2d.shape[0]
    wt = weight.T                      # one-time (in, out) layout for the MXU
    b2d = bias.reshape(1, FEAT)

    # Row tile: multiple of 8 (16 for sub-32-bit packing), clamped so tiny
    # inputs still compile with a single block.
    row_align = 8 if jnp.dtype(x2d.dtype).itemsize >= 4 else 16
    tm = _round_up(max(row_align, min(tm, _round_up(n, row_align))), row_align)
    grid = (pl.cdiv(n, tm),)

    cost = pl.CostEstimate(
        flops=2 * n * FEAT * FEAT,
        bytes_accessed=2 * 4 * n * FEAT + 4 * FEAT * FEAT + 4 * FEAT,
        transcendentals=0,
    )

    out = pl.pallas_call(
        aggr_kernel,
        out_shape=jax.ShapeDtypeStruct((n, FEAT), x2d.dtype),
        grid_spec=pltpu.PrefetchScalarGridSpec(
            num_scalar_prefetch=0,
            grid=grid,
            in_specs=[
                pl.BlockSpec((tm, FEAT), lambda i: (i, 0)),      # streamed rows
                pl.BlockSpec((FEAT, FEAT), lambda i: (0, 0)),    # resident W^T
                pl.BlockSpec((1, FEAT), lambda i: (0, 0)),       # resident bias
            ],
            out_specs=pl.BlockSpec((tm, FEAT), lambda i: (i, 0)),
        ),
        compiler_params=pltpu.CompilerParams(
            dimension_semantics=("parallel",),
            vmem_limit_bytes=_VMEM_LIMIT_BYTES,
        ),
        cost_estimate=cost,
    )(x2d, wt, b2d)
    return out


def reference_forward(x, weight, bias):
    y = jnp.maximum(x, 0.0) @ weight.T + bias
    return y.reshape(-1, FEAT)


if __name__ == "__main__":
    key = jax.random.PRNGKey(0)
    kx, kw, kb, kx2 = jax.random.split(key, 4)

    # Deterministic parameter init (mimics nn.Linear uniform(-1/sqrt(in), 1/sqrt(in))).
    bound = 1.0 / jnp.sqrt(jnp.float32(FEAT))
    weight = jax.random.uniform(kw, (FEAT, FEAT), jnp.float32, -bound, bound)
    bias = jax.random.uniform(kb, (FEAT,), jnp.float32, -bound, bound)

    # Small shape consistent with the module: batch of 2 sequences of 8 vectors of 51 feats.
    x = jax.random.normal(kx, (2, 8, FEAT), dtype=jnp.float32)
    out = aggr_net_forward(x, weight, bias)
    jax.block_until_ready(out)
    ref = reference_forward(x, weight, bias)
    assert out.shape == (16, FEAT), out.shape
    assert jnp.allclose(out, ref, atol=1e-5, rtol=1e-5), float(jnp.max(jnp.abs(out - ref)))

    # Second check: exercise a multi-block grid with a ragged last tile.
    x_big = jax.random.normal(kx2, (3, 100, FEAT), dtype=jnp.float32)  # n = 300
    out_big = aggr_net_forward(x_big, weight, bias, tm=128)            # grid = (3,), last block partial
    jax.block_until_ready(out_big)
    ref_big = reference_forward(x_big, weight, bias)
    assert out_big.shape == (300, FEAT), out_big.shape
    assert jnp.allclose(out_big, ref_big, atol=1e-5, rtol=1e-5), float(
        jnp.max(jnp.abs(out_big - ref_big))
    )

    print("KERNEL_OK")
</pallas_src>

<mosaic_0001>
module attributes {stable_mosaic.version = 11 : i64} {
  func.func @aggr_kernel(%arg0: i32, %arg1: memref<16x51xf32, #tpu.memory_space<vmem>>, %arg2: memref<51x51xf32, #tpu.memory_space<vmem>>, %arg3: memref<1x51xf32, #tpu.memory_space<vmem>>, %arg4: memref<16x51xf32, #tpu.memory_space<vmem>>) attributes {dimension_semantics = [#tpu.dimension_semantics<parallel>], iteration_bounds = array<i64: 1>, scalar_prefetch = 0 : i64, scratch_operands = 0 : i64, tpu.core_type = #tpu.core_type<tc>, window_params = [{transform_indices = @transform_0, window_bounds = array<i64: 16, 51>}, {pipeline_mode = #tpu.pipeline_mode<synchronous>, transform_indices = @transform_1, window_bounds = array<i64: 51, 51>}, {pipeline_mode = #tpu.pipeline_mode<synchronous>, transform_indices = @transform_2, window_bounds = array<i64: 1, 51>}, {transform_indices = @transform_3, window_bounds = array<i64: 16, 51>}]} {
    %c0 = arith.constant 0 : index
    %c0_0 = arith.constant 0 : index
    %0 = vector.load %arg1[%c0, %c0_0] : memref<16x51xf32, #tpu.memory_space<vmem>>, vector<16x51xf32>
    %cst = arith.constant 0.000000e+00 : f32
    %1 = vector.broadcast %cst : f32 to vector<16x51xf32>
    %2 = arith.maximumf %0, %1 : vector<16x51xf32>
    %c0_1 = arith.constant 0 : index
    %c0_2 = arith.constant 0 : index
    %3 = vector.load %arg2[%c0_1, %c0_2] : memref<51x51xf32, #tpu.memory_space<vmem>>, vector<51x51xf32>
    %cst_3 = arith.constant dense<0.000000e+00> : vector<16x51xf32>
    %4 = tpu.matmul %2, %3, %cst_3 {dimension_numbers = #tpu.dot_dimension_numbers<[1], [0], [0], [1], [0, 0, 1, 1], [], []>} : vector<16x51xf32>, vector<51x51xf32>, vector<16x51xf32> -> vector<16x51xf32>
    %c0_4 = arith.constant 0 : index
    %c0_5 = arith.constant 0 : index
    %5 = vector.load %arg3[%c0_4, %c0_5] : memref<1x51xf32, #tpu.memory_space<vmem>>, vector<1x51xf32>
    %6 = vector.broadcast %5 : vector<1x51xf32> to vector<16x51xf32>
    %7 = arith.addf %4, %6 : vector<16x51xf32>
    %c0_6 = arith.constant 0 : index
    %c0_7 = arith.constant 0 : index
    %8 = vector.load %arg4[%c0_6, %c0_7] : memref<16x51xf32, #tpu.memory_space<vmem>>, vector<16x51xf32>
    tpu.vector_store %arg4[%c0_6, %c0_7], %7 {strides = array<i32>} : memref<16x51xf32, #tpu.memory_space<vmem>>, vector<16x51xf32>,
    return
  }
  func.func @transform_0(%arg0: i32) -> (i32, i32) {
    %c0_i32 = arith.constant 0 : i32
    %c0_i32_0 = arith.constant 0 : i32
    return %arg0, %c0_i32 : i32, i32
  }
  func.func @transform_1(%arg0: i32) -> (i32, i32) {
    %c0_i32 = arith.constant 0 : i32
    %c0_i32_0 = arith.constant 0 : i32
    %c0_i32_1 = arith.constant 0 : i32
    return %c0_i32, %c0_i32_0 : i32, i32
  }
  func.func @transform_2(%arg0: i32) -> (i32, i32) {
    %c0_i32 = arith.constant 0 : i32
    %c0_i32_0 = arith.constant 0 : i32
    %c0_i32_1 = arith.constant 0 : i32
    return %c0_i32, %c0_i32_0 : i32, i32
  }
  func.func @transform_3(%arg0: i32) -> (i32, i32) {
    %c0_i32 = arith.constant 0 : i32
    %c0_i32_0 = arith.constant 0 : i32
    return %arg0, %c0_i32 : i32, i32
  }
}

</mosaic_0001>

<llo_original>
// kernel: tpu_custom_call.1
$region0: #{tpu_custom_call.1}
  #allocation0 [shape = 'u32[]', space=smem, size = 0x4, offset = 0x4, fixed_abs, tag = 'smem constant byte address 0x4 - core index']
  #allocation1 [shape = 'u32[144,128]{1,0:T(1,128)}', space=vmem, size = 0x12000, scoped, tag = 'internal scratch']
  %s0 = inlined_call_operand.hbm [shape: f32[16,51], index: 0, kind: input, shape index: {}]
  %s1 = inlined_call_operand.hbm [shape: f32[51,51], index: 1, kind: input, shape index: {}]
  %s2 = inlined_call_operand.vmem [shape: f32[1,51], index: 2, kind: input, shape index: {}]
  %s3 = inlined_call_operand.hbm [shape: f32[16,51], index: 3, kind: output, shape index: {}]
  %s4 = sld [smem:[#allocation0]]
  $region30: #{tpu_custom_call.1} parent=0
    _
  %s6 = ssub.s32 1, %s4
  %s7 = scalar_select 0, %s6, %s4
  $region1: #{tpu_custom_call.1} parent=0
    #allocation2 [shape = 'u8[8192]{0}', space=vmem, size = 0x2000, scoped, tag = 'input window, operand 0, single buffered']
    #allocation3 [shape = 's32[1]{0}', space=sflag, size = 0x4, scoped, tag = 'scoped memory for tpu_custom_call.1']
    #allocation4 [shape = 's32[1]{0}', space=sflag, size = 0x4, scoped, tag = 'scoped memory for tpu_custom_call.1']
    #allocation5 [shape = 'u8[28672]{0}', space=vmem, size = 0x7000, scoped, tag = 'input window, operand 1, single buffered']
    #allocation6 [shape = 's32[1]{0}', space=sflag, size = 0x4, scoped, tag = 'scoped memory for tpu_custom_call.1']
    #allocation7 [shape = 'u8[8192]{0}', space=vmem, size = 0x2000, scoped, tag = 'output window, operand 0, single buffered']
    %8 = vsyncpa [#allocation3], 0
    %9 = vsyncpa [#allocation6], 0
    %10 = vsyncpa [#allocation4], 0
    // Predicated region
    $region2: #{tpu_custom_call.1} parent=1 // pred_check
      _
    $region3: #{tpu_custom_call.1} parent=1 // pred_check_branch
      %12 = sbr.rel (0) target = $region5
    $region4: #{tpu_custom_call.1} parent=1 // pred_region
      %s14 = ssub.s32 256, 256
      %15 = vsyncadd [#allocation3], %s14
      %s16 = sshll.u32 [#allocation2], 4
      %s17 = int_to_ptr.vmem [resolvable:$true] %s16
      %22 = dma.hbm_to_vmem [thread:$0]  %s0, 256, %s17, [#allocation3], 128, 128, 8
    $region5: #{tpu_custom_call.1} parent=1 // pred_fallthru
      _
    // Predicated region
    $region6: #{tpu_custom_call.1} parent=1 // pred_check
      _
    $region7: #{tpu_custom_call.1} parent=1 // pred_check_branch
      %24 = sbr.rel (0) target = $region9
    $region8: #{tpu_custom_call.1} parent=1 // pred_region
      %s26 = ssub.s32 896, 896
      %27 = vsyncadd [#allocation6], %s26
      %s28 = sshll.u32 [#allocation5], 4
      %s29 = int_to_ptr.vmem [resolvable:$true] %s28
      %34 = dma.hbm_to_vmem [thread:$0]  %s1, 896, %s29, [#allocation6], 128, 128, 8
    $region9: #{tpu_custom_call.1} parent=1 // pred_fallthru
      _
    // Predicated region
    $region10: #{tpu_custom_call.1} parent=1 // pred_check
      _
    $region11: #{tpu_custom_call.1} parent=1 // pred_check_branch
      %36 = sbr.rel (0) target = $region13
    $region12: #{tpu_custom_call.1} parent=1 // pred_region
      _
    $region13: #{tpu_custom_call.1} parent=1 // pred_fallthru
      _
    // Predicated region
    $region14: #{tpu_custom_call.1} parent=1 // pred_check
      _
    $region15: #{tpu_custom_call.1} parent=1 // pred_check_branch
      %38 = sbr.rel (0) target = $region17
    $region16: #{tpu_custom_call.1} parent=1 // pred_region
      %39 = dma.done [#allocation3], 256
    $region17: #{tpu_custom_call.1} parent=1 // pred_fallthru
      _
    // Predicated region
    $region18: #{tpu_custom_call.1} parent=1 // pred_check
      _
    $region19: #{tpu_custom_call.1} parent=1 // pred_check_branch
      %41 = sbr.rel (0) target = $region21
    $region20: #{tpu_custom_call.1} parent=1 // pred_region
      %42 = dma.done [#allocation6], 896
    $region21: #{tpu_custom_call.1} parent=1 // pred_fallthru
      _
    %v43 = vld [vmem:[#allocation2] sm:$0xff]
    %v44 = vld [vmem:[#allocation2 + $0x8] sm:$0xff]
    %v45 = vmax.f32 %v43, 0.0
    %v46 = vmax.f32 %v44, 0.0
    %v47 = vld [vmem:[#allocation5] sm:$0xff]
    %v48 = vld [vmem:[#allocation5 + $0x8] sm:$0xff]
    %v49 = vld [vmem:[#allocation5 + $0x10] sm:$0xff]
    %v50 = vld [vmem:[#allocation5 + $0x18] sm:$0xff]
    %v51 = vld [vmem:[#allocation5 + $0x20] sm:$0xff]
    %v52 = vld [vmem:[#allocation5 + $0x28] sm:$0xff]
    %v53 = vld [vmem:[#allocation5 + $0x30] sm:$0x7]
    %v54 = vld [vmem:[%s2] sm:$0x1]
    %v56 = vlaneseq
    %v57 = vshrl.u32 %v56, 7
    %v58 = vsub.s32 0, %v57
    %v59 = vrot.slane %v54, %v58
    %vm61 = vcmask 416768
    %v63 = vsel %vm61, %v45, 0
    %v66 = vsel %vm61, %v46, 0
    %vm68 = vcmask 1042432
    %v70 = vsel %vm68, %v53, 0
    %72 = vmatprep.subr.mxu0 0.0
    %73 = vmatpush1.msra.mxu0 %v47
    %74 = vmatprep.subr.mxu0 0.0
    %75 = vmatpush1.msra.mxu0 %v48
    %76 = vmatprep.subr.mxu0 0.0
    %77 = vmatpush1.msra.mxu0 %v49
    %78 = vmatprep.subr.mxu0 0.0
    %79 = vmatpush1.msra.mxu0 %v50
    %80 = vmatprep.subr.mxu0 0.0
    %81 = vmatpush1.msra.mxu0 %v51
    %82 = vmatprep.subr.mxu0 0.0
    %83 = vmatpush1.msra.mxu0 %v52
    %84 = vmatprep.subr.mxu0 0.0
    %85 = vmatpush1.msra.mxu0 %v70
    %86 = vmatprep.subr.mxu0 0.0
    %87 = vmatpush1.msra.mxu0 0.0
    %88 = vmatprep.subr.mxu0 0.0
    %89 = vmatpush1.msra.mxu0 0.0
    %90 = vmatprep.subr.mxu0 0.0
    %91 = vmatpush1.msra.mxu0 0.0
    %92 = vmatprep.subr.mxu0 0.0
    %93 = vmatpush1.msra.mxu0 0.0
    %94 = vmatprep.subr.mxu0 0.0
    %95 = vmatpush1.msra.mxu0 0.0
    %96 = vmatprep.subr.mxu0 0.0
    %97 = vmatpush1.msra.mxu0 0.0
    %98 = vmatprep.subr.mxu0 0.0
    %99 = vmatpush1.msra.mxu0 0.0
    %100 = vmatprep.subr.mxu0 0.0
    %101 = vmatpush1.msra.mxu0 0.0
    %102 = vmatprep.subr.mxu0 0.0
    %103 = vmatpush1.msra.mxu0 0.0
    %104 = vmatprep.subr.mxu0 0.0
    %105 = vmatpush1.msra.mxu0 0.0
    %106 = vmatprep.subr.mxu0 0.0
    %107 = vmatpush1.msra.mxu0 0.0
    %108 = vmatprep.subr.mxu0 0.0
    %109 = vmatpush1.msra.mxu0 0.0
    %110 = vmatprep.subr.mxu0 0.0
    %111 = vmatpush1.msra.mxu0 0.0
    %112 = vmatprep.subr.mxu0 0.0
    %113 = vmatpush1.msra.mxu0 0.0
    %114 = vmatprep.subr.mxu0 0.0
    %115 = vmatpush1.msra.mxu0 0.0
    %116 = vmatprep.subr.mxu0 0.0
    %117 = vmatpush1.msra.mxu0 0.0
    %118 = vmatprep.subr.mxu0 0.0
    %119 = vmatpush1.msra.mxu0 0.0
    %120 = vmatprep.subr.mxu0 0.0
    %121 = vmatpush1.msra.mxu0 0.0
    %122 = vmatprep.subr.mxu0 0.0
    %123 = vmatpush1.msra.mxu0 0.0
    %124 = vmatprep.subr.mxu0 0.0
    %125 = vmatpush1.msra.mxu0 0.0
    %126 = vmatprep.subr.mxu0 0.0
    %127 = vmatpush1.msra.mxu0 0.0
    %128 = vmatprep.subr.mxu0 0.0
    %129 = vmatpush1.msra.mxu0 0.0
    %130 = vmatprep.subr.mxu0 0.0
    %131 = vmatpush1.msra.mxu0 0.0
    %132 = vmatprep.subr.mxu0 0.0
    %133 = vmatpush1.msra.mxu0 0.0
    %134 = vmatprep.subr.mxu0 0.0
    %135 = vmatpush1.msra.mxu0 0.0
    %136 = vmatprep.mubr.f32.mxu0 0.0
    %137 = vmatmul.mubr.f32.gmra.mrb[0].mxu0 %v63
    %v138 = vpop.f32.mrb[0].mxu0
    %v139 = vadd.f32 %v59, %v138
    %v140 = vpop.f32.mrb[0].mxu0
    %141 = vmatprep.mubr.f32.mxu0 0.0
    %142 = vmatmul.mubr.f32.gmra.mrb[0].mxu0 %v66
    %v143 = vpop.f32.mrb[0].mxu0
    %v144 = vadd.f32 %v59, %v143
    %v145 = vpop.f32.mrb[0].mxu0
    %146 = vdwg.mxu0
    %147 = vst.msk [vmem:[#allocation7] sm:$0xff] %vm61, %v139
    %148 = vst.msk [vmem:[#allocation7 + $0x8] sm:$0xff] %vm61, %v144
    // Predicated region
    $region22: #{tpu_custom_call.1} parent=1 // pred_check
      _
    $region23: #{tpu_custom_call.1} parent=1 // pred_check_branch
      %150 = sbr.rel (0) target = $region25
    $region24: #{tpu_custom_call.1} parent=1 // pred_region
      %s152 = ssub.s32 256, 256
      %153 = vsyncadd [#allocation4], %s152
      %s154 = sshll.u32 [#allocation7], 4
      %s155 = int_to_ptr.vmem [resolvable:$true] %s154
      %160 = dma.vmem_to_hbm [thread:$0]  %s155, 256, %s3, [#allocation4], 128, 128, 8
    $region25: #{tpu_custom_call.1} parent=1 // pred_fallthru
      _
    // Predicated region
    $region26: #{tpu_custom_call.1} parent=1 // pred_check
      _
    $region27: #{tpu_custom_call.1} parent=1 // pred_check_branch
      %162 = sbr.rel (0) target = $region29
    $region28: #{tpu_custom_call.1} parent=1 // pred_region
      %163 = dma.done [#allocation4], 256
    $region29: #{tpu_custom_call.1} parent=1 // pred_fallthru
      _
    %164 = vsyncpa [#allocation3], 1
    %165 = vsyncpa [#allocation6], 1
    %166 = vsyncpa [#allocation4], 1

</llo_original>
